<compile_context>
chip_gen: v6e
topology: v6e:2x2x1
jax: 0.10.0
libtpu: 0.0.40
codegen_flags: <defaults>
</compile_context>

<pallas_src>
import functools
import math

import jax
import jax.numpy as jnp
from jax.experimental import pallas as pl
from jax.experimental.pallas import tpu as pltpu

LOG_STD_MIN = -20.0
LOG_STD_MAX = 2.0
STD_MIN = 1e-6
LOG_STD_FLOOR = math.log(STD_MIN)          # log of the std clamp (matches torch clamp)
HALF_LOG_2PI = 0.5 * math.log(2.0 * math.pi)
LOG_2 = math.log(2.0)

DEFAULT_TILE_N = 8192                      # batch (lane) elements per grid step


def _round_up(x: int, m: int) -> int:
    return (x + m - 1) // m * m


def _select_tiling(n: int, tile_n: int):
    """Pick a lane-tile (multiple of 128) and padded batch size.

    Guarantees >= 2 grid steps whenever the padded batch allows it, so the
    "parallel" grid axis actually feeds both TensorCores on v7x; no-op on
    v5e/v6e (single TC)."""
    n128 = _round_up(max(n, 1), 128)
    half = _round_up((n128 + 1) // 2, 128)
    tile = max(128, (min(tile_n, half) // 128) * 128)
    n_pad = _round_up(n128, tile)
    return tile, n_pad


def _make_actor_kernel(num_mlp_layers: int):
    """Kernel for the MLP trunk (batch-in-lanes) + fused (mu | log_std) head."""

    def actor_kernel(*refs):
        # ref layout:
        #   x_ref   (obs, T)  bf16
        #   eps_ref (1, T)    f32
        #   (w_i (out,in) bf16, b_i (out,1) f32) * num_mlp_layers
        #   w_heads (2, 32) f32, b_heads (2, 1) f32
        #   out_ref (2, T) f32   [row 0: tanh(pi), row 1: logp_pi]
        x_ref, eps_ref = refs[0], refs[1]
        mlp_refs = refs[2:2 + 2 * num_mlp_layers]
        w_heads_ref = refs[2 + 2 * num_mlp_layers]
        b_heads_ref = refs[3 + 2 * num_mlp_layers]
        out_ref = refs[-1]

        # --- MLP trunk: bf16 MXU matmuls (out,in)@(in,T), f32 accumulation ---
        h = x_ref[...]                              # bf16 (obs, T)
        for i in range(num_mlp_layers):
            w = mlp_refs[2 * i][...]                # bf16 (out, in)
            b = mlp_refs[2 * i + 1][...]            # f32  (out, 1)
            h32 = jnp.dot(w, h, preferred_element_type=jnp.float32) + b
            if i < num_mlp_layers - 1:
                h = jnp.maximum(h32, 0.0).astype(jnp.bfloat16)
            else:
                h = h32                             # last trunk layer kept in f32

        # --- fused mu / log_std head in f32: (2,32)@(32,T) -> (2,T) ---
        heads = jnp.dot(w_heads_ref[...], h,
                        preferred_element_type=jnp.float32) + b_heads_ref[...]
        mean = heads[0:1, :]
        log_std = jnp.clip(heads[1:2, :], LOG_STD_MIN, LOG_STD_MAX)

        # std = clamp(exp(log_std), 1e-6); log(std) == max(log_std, log(1e-6)).
        std = jnp.maximum(jnp.exp(log_std), STD_MIN)
        log_std_c = jnp.maximum(log_std, LOG_STD_FLOOR)

        # rsample: pi = mean + std * eps.
        eps = eps_ref[...]
        pi_action = mean + std * eps

        # Normal(mean, std).log_prob(pi): pi - mean == std*eps.
        log_prob = -0.5 * eps * eps - log_std_c - HALF_LOG_2PI

        # tanh correction: 2 * (log 2 - a - softplus(-2a)), stable softplus.
        z = -2.0 * pi_action
        softplus_z = jnp.maximum(z, 0.0) + jnp.log1p(jnp.exp(-jnp.abs(z)))
        corr = 2.0 * (LOG_2 - pi_action - softplus_z)

        # Direct lane-dense sub-row stores (action_size == 1 -> sums are identity).
        out_ref[0:1, :] = jnp.tanh(pi_action)
        out_ref[1:2, :] = log_prob - corr

    return actor_kernel


def init_actor_params(key, observation_size, hidden_dims):
    """Torch-like fan-in uniform init.  Weights stored (in_features, out_features)
    for the pure-JAX reference; pack_actor_params transposes for the kernel."""
    layer_dims = []
    for i in range(len(hidden_dims)):
        in_dim = observation_size if i == 0 else hidden_dims[i - 1]
        layer_dims.append((in_dim, hidden_dims[i]))
    layer_dims.append((hidden_dims[-1], 32))

    mlp = []
    for (din, dout) in layer_dims:
        key, kw, kb = jax.random.split(key, 3)
        bound = 1.0 / math.sqrt(din)
        w = jax.random.uniform(kw, (din, dout), jnp.float32, -bound, bound)
        b = jax.random.uniform(kb, (1, dout), jnp.float32, -bound, bound)
        mlp.append((w, b))

    heads = []
    for _ in range(2):  # mu_layer, log_std_layer: Linear(32, 1)
        key, kw, kb = jax.random.split(key, 3)
        bound = 1.0 / math.sqrt(32.0)
        w = jax.random.uniform(kw, (32, 1), jnp.float32, -bound, bound)
        b = jax.random.uniform(kb, (1, 1), jnp.float32, -bound, bound)
        heads.append((w, b))
    return mlp, heads[0], heads[1]


def pack_actor_params(mlp_params, mu_params, log_std_params):
    """Kernel layout: trunk weights transposed (out,in) bf16, biases (out,1) f32,
    the two 1-wide heads fused into one (2,32) f32 weight / (2,1) f32 bias."""
    flat = []
    for (w, b) in mlp_params:
        flat.append(jnp.asarray(w).T.astype(jnp.bfloat16))              # (out, in)
        flat.append(jnp.asarray(b).reshape(-1, 1).astype(jnp.float32))  # (out, 1)
    w_mu, b_mu = mu_params
    w_ls, b_ls = log_std_params
    w_heads = jnp.concatenate([w_mu, w_ls], axis=1).T.astype(jnp.float32)   # (2, 32)
    b_heads = jnp.concatenate([b_mu, b_ls], axis=1).reshape(2, 1).astype(jnp.float32)
    flat.append(w_heads)
    flat.append(b_heads)
    return tuple(flat)


@functools.partial(jax.jit, static_argnames=("num_mlp_layers", "tile_n"))
def _actor_forward_padded(x_t, eps_t, flat_params, num_mlp_layers, tile_n):
    obs, n_pad = x_t.shape
    kernel = _make_actor_kernel(num_mlp_layers)

    batch_map = lambda i: (0, i)   # batch lives in the lane (last) dim
    const_map = lambda i: (0, 0)   # weights stay resident in VMEM

    in_specs = [
        pl.BlockSpec((obs, tile_n), batch_map),   # x  (bf16)
        pl.BlockSpec((1, tile_n), batch_map),     # eps (f32)
    ]
    for p in flat_params:
        in_specs.append(pl.BlockSpec(p.shape, const_map))

    out = pl.pallas_call(
        kernel,
        grid=(n_pad // tile_n,),
        out_shape=jax.ShapeDtypeStruct((2, n_pad), jnp.float32),
        in_specs=in_specs,
        out_specs=pl.BlockSpec((2, tile_n), batch_map),
        compiler_params=pltpu.CompilerParams(
            dimension_semantics=("parallel",),      # v7x megacore batch split
            # Explicit budget: ~4 MiB actually used at TILE_N=8192; 32 MiB keeps
            # ample headroom and is < half of v7x's 64 MiB physical VMEM.
            vmem_limit_bytes=32 * 1024 * 1024,
        ),
    )(x_t, eps_t, *flat_params)
    return out


def actor_forward(x, eps, flat_params, num_mlp_layers, tile_n=DEFAULT_TILE_N):
    """Returns (pi_action (N,1), logp_pi (N,)) like Actor.forward."""
    n = x.shape[0]
    tile, n_pad = _select_tiling(n, tile_n)
    pad = n_pad - n
    # Batch-in-lanes staging: transpose + pad lane dim; x cast to bf16 HBM-side.
    x_t = jnp.pad(x, ((0, pad), (0, 0))).T.astype(jnp.bfloat16)    # (obs, n_pad)
    eps_t = jnp.pad(eps, ((0, pad), (0, 0))).T.astype(jnp.float32)  # (1, n_pad)
    out = _actor_forward_padded(x_t, eps_t, tuple(flat_params),
                                num_mlp_layers=num_mlp_layers, tile_n=tile)
    return out[0, :n].reshape(n, 1), out[1, :n]


def actor_reference(x, eps, mlp_params, mu_params, log_std_params):
    """Pure-JAX f32 reference mirroring the PyTorch module."""
    h = x
    for i, (w, b) in enumerate(mlp_params):
        h = h @ w + b
        if i < len(mlp_params) - 1:
            h = jnp.maximum(h, 0.0)
    mean = h @ mu_params[0] + mu_params[1]
    log_std = jnp.clip(h @ log_std_params[0] + log_std_params[1],
                       LOG_STD_MIN, LOG_STD_MAX)
    std = jnp.maximum(jnp.exp(log_std), STD_MIN)
    pi = mean + std * eps
    logp = (-((pi - mean) ** 2) / (2.0 * std * std) - jnp.log(std) - HALF_LOG_2PI)
    logp = jnp.sum(logp, axis=-1)
    logp = logp - jnp.sum(2.0 * (LOG_2 - pi - jax.nn.softplus(-2.0 * pi)), axis=-1)
    return jnp.tanh(pi), logp


if __name__ == "__main__":
    # Small shapes consistent with the module (obs=16, hidden=[64,32] -> 32 -> 1).
    N = 8
    observation_size = 16
    hidden_dims = [64, 32]
    num_mlp_layers = len(hidden_dims) + 1   # trunk linears: [16,64],[64,32],[32,32]

    key = jax.random.PRNGKey(0)
    key, kx, keps, kp = jax.random.split(key, 4)

    x = jax.random.normal(kx, (N, observation_size), jnp.float32)
    eps = jax.random.normal(keps, (N, 1), jnp.float32)  # noise for rsample()

    mlp_params, mu_params, ls_params = init_actor_params(
        kp, observation_size, hidden_dims)
    flat_params = pack_actor_params(mlp_params, mu_params, ls_params)

    pi_action, logp_pi = actor_forward(x, eps, flat_params,
                                       num_mlp_layers=num_mlp_layers)
    jax.block_until_ready((pi_action, logp_pi))

    assert pi_action.shape == (N, 1)
    assert logp_pi.shape == (N,)
    assert bool(jnp.all(jnp.isfinite(pi_action)))
    assert bool(jnp.all(jnp.isfinite(logp_pi)))

    # Correctness vs. f32 reference (trunk matmuls are bf16 -> loose tolerance).
    pi_ref, logp_ref = actor_reference(x, eps, mlp_params, mu_params, ls_params)
    assert float(jnp.max(jnp.abs(pi_action - pi_ref))) < 0.1
    assert float(jnp.max(jnp.abs(logp_pi - logp_ref))) < 0.25

    # Larger, non-multiple batch exercising the multi-step grid + padding path
    # (default tiling picks 2 grid steps here -> both v7x TCs get work).
    key, kx2, keps2 = jax.random.split(key, 3)
    N2 = 300
    x2 = jax.random.normal(kx2, (N2, observation_size), jnp.float32)
    eps2 = jax.random.normal(keps2, (N2, 1), jnp.float32)
    pi2, logp2 = actor_forward(x2, eps2, flat_params,
                               num_mlp_layers=num_mlp_layers)
    jax.block_until_ready((pi2, logp2))
    assert pi2.shape == (N2, 1) and logp2.shape == (N2,)
    assert bool(jnp.all(jnp.isfinite(pi2))) and bool(jnp.all(jnp.isfinite(logp2)))
    pi2_ref, logp2_ref = actor_reference(x2, eps2, mlp_params, mu_params, ls_params)
    assert float(jnp.max(jnp.abs(pi2 - pi2_ref))) < 0.1
    assert float(jnp.max(jnp.abs(logp2 - logp2_ref))) < 0.25

    # Explicit small-tile run to exercise a 3-step grid.
    pi3, logp3 = actor_forward(x2, eps2, flat_params,
                               num_mlp_layers=num_mlp_layers, tile_n=128)
    jax.block_until_ready((pi3, logp3))
    assert float(jnp.max(jnp.abs(pi3 - pi2_ref))) < 0.1
    assert float(jnp.max(jnp.abs(logp3 - logp2_ref))) < 0.25

    print("KERNEL_OK")
</pallas_src>

<mosaic_0001>
module attributes {stable_mosaic.version = 11 : i64} {
  func.func @actor_kernel(%arg0: i32, %arg1: memref<16x128xbf16, #tpu.memory_space<vmem>>, %arg2: memref<1x128xf32, #tpu.memory_space<vmem>>, %arg3: memref<64x16xbf16, #tpu.memory_space<vmem>>, %arg4: memref<64x1xf32, #tpu.memory_space<vmem>>, %arg5: memref<32x64xbf16, #tpu.memory_space<vmem>>, %arg6: memref<32x1xf32, #tpu.memory_space<vmem>>, %arg7: memref<32x32xbf16, #tpu.memory_space<vmem>>, %arg8: memref<32x1xf32, #tpu.memory_space<vmem>>, %arg9: memref<2x32xf32, #tpu.memory_space<vmem>>, %arg10: memref<2x1xf32, #tpu.memory_space<vmem>>, %arg11: memref<2x128xf32, #tpu.memory_space<vmem>>) attributes {dimension_semantics = [#tpu.dimension_semantics<parallel>], iteration_bounds = array<i64: 1>, scalar_prefetch = 0 : i64, scratch_operands = 0 : i64, tpu.core_type = #tpu.core_type<tc>, window_params = [{transform_indices = @transform_0, window_bounds = array<i64: 16, 128>}, {transform_indices = @transform_1, window_bounds = array<i64: 1, 128>}, {pipeline_mode = #tpu.pipeline_mode<synchronous>, transform_indices = @transform_2, window_bounds = array<i64: 64, 16>}, {pipeline_mode = #tpu.pipeline_mode<synchronous>, transform_indices = @transform_3, window_bounds = array<i64: 64, 1>}, {pipeline_mode = #tpu.pipeline_mode<synchronous>, transform_indices = @transform_4, window_bounds = array<i64: 32, 64>}, {pipeline_mode = #tpu.pipeline_mode<synchronous>, transform_indices = @transform_5, window_bounds = array<i64: 32, 1>}, {pipeline_mode = #tpu.pipeline_mode<synchronous>, transform_indices = @transform_6, window_bounds = array<i64: 32, 32>}, {pipeline_mode = #tpu.pipeline_mode<synchronous>, transform_indices = @transform_7, window_bounds = array<i64: 32, 1>}, {pipeline_mode = #tpu.pipeline_mode<synchronous>, transform_indices = @transform_8, window_bounds = array<i64: 2, 32>}, {pipeline_mode = #tpu.pipeline_mode<synchronous>, transform_indices = @transform_9, window_bounds = array<i64: 2, 1>}, {transform_indices = @transform_10, window_bounds = array<i64: 2, 128>}]} {
    %c0 = arith.constant 0 : index
    %c0_0 = arith.constant 0 : index
    %0 = vector.load %arg1[%c0, %c0_0] : memref<16x128xbf16, #tpu.memory_space<vmem>>, vector<16x128xbf16>
    %c0_1 = arith.constant 0 : index
    %c0_2 = arith.constant 0 : index
    %1 = vector.load %arg3[%c0_1, %c0_2] : memref<64x16xbf16, #tpu.memory_space<vmem>>, vector<64x16xbf16>
    %c0_3 = arith.constant 0 : index
    %c0_4 = arith.constant 0 : index
    %2 = vector.load %arg4[%c0_3, %c0_4] : memref<64x1xf32, #tpu.memory_space<vmem>>, vector<64x1xf32>
    %cst = arith.constant dense<0.000000e+00> : vector<64x128xf32>
    %3 = tpu.matmul %1, %0, %cst {dimension_numbers = #tpu.dot_dimension_numbers<[1], [0], [0], [1], [0, 0, 1, 1], [], []>} : vector<64x16xbf16>, vector<16x128xbf16>, vector<64x128xf32> -> vector<64x128xf32>
    %4 = vector.broadcast %2 : vector<64x1xf32> to vector<64x128xf32>
    %5 = arith.addf %3, %4 : vector<64x128xf32>
    %cst_5 = arith.constant 0.000000e+00 : f32
    %6 = vector.broadcast %cst_5 : f32 to vector<64x128xf32>
    %7 = arith.maximumf %5, %6 : vector<64x128xf32>
    %8 = arith.truncf %7 : vector<64x128xf32> to vector<64x128xbf16>
    %c0_6 = arith.constant 0 : index
    %c0_7 = arith.constant 0 : index
    %9 = vector.load %arg5[%c0_6, %c0_7] : memref<32x64xbf16, #tpu.memory_space<vmem>>, vector<32x64xbf16>
    %c0_8 = arith.constant 0 : index
    %c0_9 = arith.constant 0 : index
    %10 = vector.load %arg6[%c0_8, %c0_9] : memref<32x1xf32, #tpu.memory_space<vmem>>, vector<32x1xf32>
    %cst_10 = arith.constant dense<0.000000e+00> : vector<32x128xf32>
    %11 = tpu.matmul %9, %8, %cst_10 {dimension_numbers = #tpu.dot_dimension_numbers<[1], [0], [0], [1], [0, 0, 1, 1], [], []>} : vector<32x64xbf16>, vector<64x128xbf16>, vector<32x128xf32> -> vector<32x128xf32>
    %12 = vector.broadcast %10 : vector<32x1xf32> to vector<32x128xf32>
    %13 = arith.addf %11, %12 : vector<32x128xf32>
    %cst_11 = arith.constant 0.000000e+00 : f32
    %14 = vector.broadcast %cst_11 : f32 to vector<32x128xf32>
    %15 = arith.maximumf %13, %14 : vector<32x128xf32>
    %16 = arith.truncf %15 : vector<32x128xf32> to vector<32x128xbf16>
    %c0_12 = arith.constant 0 : index
    %c0_13 = arith.constant 0 : index
    %17 = vector.load %arg7[%c0_12, %c0_13] : memref<32x32xbf16, #tpu.memory_space<vmem>>, vector<32x32xbf16>
    %c0_14 = arith.constant 0 : index
    %c0_15 = arith.constant 0 : index
    %18 = vector.load %arg8[%c0_14, %c0_15] : memref<32x1xf32, #tpu.memory_space<vmem>>, vector<32x1xf32>
    %cst_16 = arith.constant dense<0.000000e+00> : vector<32x128xf32>
    %19 = tpu.matmul %17, %16, %cst_16 {dimension_numbers = #tpu.dot_dimension_numbers<[1], [0], [0], [1], [0, 0, 1, 1], [], []>} : vector<32x32xbf16>, vector<32x128xbf16>, vector<32x128xf32> -> vector<32x128xf32>
    %20 = vector.broadcast %18 : vector<32x1xf32> to vector<32x128xf32>
    %21 = arith.addf %19, %20 : vector<32x128xf32>
    %c0_17 = arith.constant 0 : index
    %c0_18 = arith.constant 0 : index
    %22 = vector.load %arg9[%c0_17, %c0_18] : memref<2x32xf32, #tpu.memory_space<vmem>>, vector<2x32xf32>
    %cst_19 = arith.constant dense<0.000000e+00> : vector<2x128xf32>
    %23 = tpu.matmul %22, %21, %cst_19 {dimension_numbers = #tpu.dot_dimension_numbers<[1], [0], [0], [1], [0, 0, 1, 1], [], []>} : vector<2x32xf32>, vector<32x128xf32>, vector<2x128xf32> -> vector<2x128xf32>
    %c0_20 = arith.constant 0 : index
    %c0_21 = arith.constant 0 : index
    %24 = vector.load %arg10[%c0_20, %c0_21] : memref<2x1xf32, #tpu.memory_space<vmem>>, vector<2x1xf32>
    %25 = vector.broadcast %24 : vector<2x1xf32> to vector<2x128xf32>
    %26 = arith.addf %23, %25 : vector<2x128xf32>
    %27 = vector.extract_strided_slice %26 {offsets = [0, 0], sizes = [1, 128], strides = [1, 1]} : vector<2x128xf32> to vector<1x128xf32>
    %28 = vector.extract_strided_slice %26 {offsets = [1, 0], sizes = [1, 128], strides = [1, 1]} : vector<2x128xf32> to vector<1x128xf32>
    %cst_22 = arith.constant -2.000000e+01 : f32
    %cst_23 = arith.constant 2.000000e+00 : f32
    %29 = vector.broadcast %cst_22 : f32 to vector<1x128xf32>
    %30 = arith.maximumf %29, %28 : vector<1x128xf32>
    %31 = vector.broadcast %cst_23 : f32 to vector<1x128xf32>
    %32 = arith.minimumf %31, %30 : vector<1x128xf32>
    %33 = math.exp %32 : vector<1x128xf32>
    %cst_24 = arith.constant 9.99999997E-7 : f32
    %34 = vector.broadcast %cst_24 : f32 to vector<1x128xf32>
    %35 = arith.maximumf %33, %34 : vector<1x128xf32>
    %cst_25 = arith.constant -13.8155107 : f32
    %36 = vector.broadcast %cst_25 : f32 to vector<1x128xf32>
    %37 = arith.maximumf %32, %36 : vector<1x128xf32>
    %c0_26 = arith.constant 0 : index
    %c0_27 = arith.constant 0 : index
    %38 = vector.load %arg2[%c0_26, %c0_27] : memref<1x128xf32, #tpu.memory_space<vmem>>, vector<1x128xf32>
    %39 = arith.mulf %35, %38 : vector<1x128xf32>
    %40 = arith.addf %27, %39 : vector<1x128xf32>
    %cst_28 = arith.constant -5.000000e-01 : f32
    %41 = vector.broadcast %cst_28 : f32 to vector<1x128xf32>
    %42 = arith.mulf %41, %38 : vector<1x128xf32>
    %43 = arith.mulf %42, %38 : vector<1x128xf32>
    %44 = arith.subf %43, %37 : vector<1x128xf32>
    %cst_29 = arith.constant 0.918938517 : f32
    %45 = vector.broadcast %cst_29 : f32 to vector<1x128xf32>
    %46 = arith.subf %44, %45 : vector<1x128xf32>
    %cst_30 = arith.constant -2.000000e+00 : f32
    %47 = vector.broadcast %cst_30 : f32 to vector<1x128xf32>
    %48 = arith.mulf %47, %40 : vector<1x128xf32>
    %cst_31 = arith.constant 0.000000e+00 : f32
    %49 = vector.broadcast %cst_31 : f32 to vector<1x128xf32>
    %50 = arith.maximumf %48, %49 : vector<1x128xf32>
    %51 = math.absf %48 : vector<1x128xf32>
    %cst_32 = arith.constant 0.000000e+00 : f32
    %52 = vector.broadcast %cst_32 : f32 to vector<1x128xf32>
    %53 = arith.subf %52, %51 : vector<1x128xf32>
    %54 = math.exp %53 : vector<1x128xf32>
    %55 = math.log1p %54 : vector<1x128xf32>
    %56 = arith.addf %50, %55 : vector<1x128xf32>
    %cst_33 = arith.constant 0.693147182 : f32
    %57 = vector.broadcast %cst_33 : f32 to vector<1x128xf32>
    %58 = arith.subf %57, %40 : vector<1x128xf32>
    %59 = arith.subf %58, %56 : vector<1x128xf32>
    %cst_34 = arith.constant 2.000000e+00 : f32
    %60 = vector.broadcast %cst_34 : f32 to vector<1x128xf32>
    %61 = arith.mulf %60, %59 : vector<1x128xf32>
    %62 = math.tanh %40 : vector<1x128xf32>
    %c0_35 = arith.constant 0 : index
    %c0_36 = arith.constant 0 : index
    %63 = vector.load %arg11[%c0_35, %c0_36] : memref<2x128xf32, #tpu.memory_space<vmem>>, vector<1x128xf32>
    tpu.vector_store %arg11[%c0_35, %c0_36], %62 {strides = array<i32>} : memref<2x128xf32, #tpu.memory_space<vmem>>, vector<1x128xf32>,
    %64 = arith.subf %46, %61 : vector<1x128xf32>
    %c1 = arith.constant 1 : index
    %c0_37 = arith.constant 0 : index
    %65 = vector.load %arg11[%c1, %c0_37] : memref<2x128xf32, #tpu.memory_space<vmem>>, vector<1x128xf32>
    tpu.vector_store %arg11[%c1, %c0_37], %64 {strides = array<i32>} : memref<2x128xf32, #tpu.memory_space<vmem>>, vector<1x128xf32>,
    return
  }
  func.func @transform_0(%arg0: i32) -> (i32, i32) {
    %c0_i32 = arith.constant 0 : i32
    %c0_i32_0 = arith.constant 0 : i32
    return %c0_i32, %arg0 : i32, i32
  }
  func.func @transform_1(%arg0: i32) -> (i32, i32) {
    %c0_i32 = arith.constant 0 : i32
    %c0_i32_0 = arith.constant 0 : i32
    return %c0_i32, %arg0 : i32, i32
  }
  func.func @transform_2(%arg0: i32) -> (i32, i32) {
    %c0_i32 = arith.constant 0 : i32
    %c0_i32_0 = arith.constant 0 : i32
    %c0_i32_1 = arith.constant 0 : i32
    return %c0_i32, %c0_i32_0 : i32, i32
  }
  func.func @transform_3(%arg0: i32) -> (i32, i32) {
    %c0_i32 = arith.constant 0 : i32
    %c0_i32_0 = arith.constant 0 : i32
    %c0_i32_1 = arith.constant 0 : i32
    return %c0_i32, %c0_i32_0 : i32, i32
  }
  func.func @transform_4(%arg0: i32) -> (i32, i32) {
    %c0_i32 = arith.constant 0 : i32
    %c0_i32_0 = arith.constant 0 : i32
    %c0_i32_1 = arith.constant 0 : i32
    return %c0_i32, %c0_i32_0 : i32, i32
  }
  func.func @transform_5(%arg0: i32) -> (i32, i32) {
    %c0_i32 = arith.constant 0 : i32
    %c0_i32_0 = arith.constant 0 : i32
    %c0_i32_1 = arith.constant 0 : i32
    return %c0_i32, %c0_i32_0 : i32, i32
  }
  func.func @transform_6(%arg0: i32) -> (i32, i32) {
    %c0_i32 = arith.constant 0 : i32
    %c0_i32_0 = arith.constant 0 : i32
    %c0_i32_1 = arith.constant 0 : i32
    return %c0_i32, %c0_i32_0 : i32, i32
  }
  func.func @transform_7(%arg0: i32) -> (i32, i32) {
    %c0_i32 = arith.constant 0 : i32
    %c0_i32_0 = arith.constant 0 : i32
    %c0_i32_1 = arith.constant 0 : i32
    return %c0_i32, %c0_i32_0 : i32, i32
  }
  func.func @transform_8(%arg0: i32) -> (i32, i32) {
    %c0_i32 = arith.constant 0 : i32
    %c0_i32_0 = arith.constant 0 : i32
    %c0_i32_1 = arith.constant 0 : i32
    return %c0_i32, %c0_i32_0 : i32, i32
  }
  func.func @transform_9(%arg0: i32) -> (i32, i32) {
    %c0_i32 = arith.constant 0 : i32
    %c0_i32_0 = arith.constant 0 : i32
    %c0_i32_1 = arith.constant 0 : i32
    return %c0_i32, %c0_i32_0 : i32, i32
  }
  func.func @transform_10(%arg0: i32) -> (i32, i32) {
    %c0_i32 = arith.constant 0 : i32
    %c0_i32_0 = arith.constant 0 : i32
    return %c0_i32, %arg0 : i32, i32
  }
}

</mosaic_0001>

<llo_original>
// kernel: _actor_forward_padded.1
$region0: #{_actor_forward_padded.1}
  #allocation0 [shape = 'u32[]', space=smem, size = 0x4, offset = 0x4, fixed_abs, tag = 'smem constant byte address 0x4 - core index']
  #allocation1 [shape = 'u32[144,128]{1,0:T(1,128)}', space=vmem, size = 0x12000, scoped, tag = 'internal scratch']
  %s0 = inlined_call_operand.vmem [shape: bf16[16,128], index: 0, kind: input, shape index: {}]
  %s1 = inlined_call_operand.vmem [shape: f32[1,128], index: 1, kind: input, shape index: {}]
  %s2 = inlined_call_operand.vmem [shape: bf16[64,16], index: 2, kind: input, shape index: {}]
  %s3 = inlined_call_operand.vmem [shape: f32[64,1], index: 3, kind: input, shape index: {}]
  %s4 = inlined_call_operand.vmem [shape: bf16[32,64], index: 4, kind: input, shape index: {}]
  %s5 = inlined_call_operand.vmem [shape: f32[32,1], index: 5, kind: input, shape index: {}]
  %s6 = inlined_call_operand.vmem [shape: bf16[32,32], index: 6, kind: input, shape index: {}]
  %s7 = inlined_call_operand.vmem [shape: f32[32,1], index: 7, kind: input, shape index: {}]
  %s8 = inlined_call_operand.vmem [shape: f32[2,32], index: 8, kind: input, shape index: {}]
  %s9 = inlined_call_operand.vmem [shape: f32[2,1], index: 9, kind: input, shape index: {}]
  %s10 = inlined_call_operand.hbm [shape: f32[2,128], index: 10, kind: output, shape index: {}]
  %s11 = sld [smem:[#allocation0]]
  $region50: #{_actor_forward_padded.1} parent=0
    _
  %s13 = ssub.s32 1, %s11
  %s14 = scalar_select 0, %s13, %s11
  $region1: #{_actor_forward_padded.1} parent=0
    #allocation2 [shape = 'u8[1024]{0}', space=vmem, size = 0x400, scoped, tag = 'output window, operand 0, single buffered']
    #allocation3 [shape = 's32[1]{0}', space=sflag, size = 0x4, scoped, tag = 'scoped memory for _actor_forward_padded.1']
    %15 = vsyncpa [#allocation3], 0
    // Predicated region
    $region2: #{_actor_forward_padded.1} parent=1 // pred_check
      _
    $region3: #{_actor_forward_padded.1} parent=1 // pred_check_branch
      %17 = sbr.rel (0) target = $region5
    $region4: #{_actor_forward_padded.1} parent=1 // pred_region
      _
    $region5: #{_actor_forward_padded.1} parent=1 // pred_fallthru
      _
    // Predicated region
    $region6: #{_actor_forward_padded.1} parent=1 // pred_check
      _
    $region7: #{_actor_forward_padded.1} parent=1 // pred_check_branch
      %19 = sbr.rel (0) target = $region9
    $region8: #{_actor_forward_padded.1} parent=1 // pred_region
      _
    $region9: #{_actor_forward_padded.1} parent=1 // pred_fallthru
      _
    // Predicated region
    $region10: #{_actor_forward_padded.1} parent=1 // pred_check
      _
    $region11: #{_actor_forward_padded.1} parent=1 // pred_check_branch
      %21 = sbr.rel (0) target = $region13
    $region12: #{_actor_forward_padded.1} parent=1 // pred_region
      _
    $region13: #{_actor_forward_padded.1} parent=1 // pred_fallthru
      _
    // Predicated region
    $region14: #{_actor_forward_padded.1} parent=1 // pred_check
      _
    $region15: #{_actor_forward_padded.1} parent=1 // pred_check_branch
      %23 = sbr.rel (0) target = $region17
    $region16: #{_actor_forward_padded.1} parent=1 // pred_region
      _
    $region17: #{_actor_forward_padded.1} parent=1 // pred_fallthru
      _
    // Predicated region
    $region18: #{_actor_forward_padded.1} parent=1 // pred_check
      _
    $region19: #{_actor_forward_padded.1} parent=1 // pred_check_branch
      %25 = sbr.rel (0) target = $region21
    $region20: #{_actor_forward_padded.1} parent=1 // pred_region
      _
    $region21: #{_actor_forward_padded.1} parent=1 // pred_fallthru
      _
    // Predicated region
    $region22: #{_actor_forward_padded.1} parent=1 // pred_check
      _
    $region23: #{_actor_forward_padded.1} parent=1 // pred_check_branch
      %27 = sbr.rel (0) target = $region25
    $region24: #{_actor_forward_padded.1} parent=1 // pred_region
      _
    $region25: #{_actor_forward_padded.1} parent=1 // pred_fallthru
      _
    // Predicated region
    $region26: #{_actor_forward_padded.1} parent=1 // pred_check
      _
    $region27: #{_actor_forward_padded.1} parent=1 // pred_check_branch
      %29 = sbr.rel (0) target = $region29
    $region28: #{_actor_forward_padded.1} parent=1 // pred_region
      _
    $region29: #{_actor_forward_padded.1} parent=1 // pred_fallthru
      _
    // Predicated region
    $region30: #{_actor_forward_padded.1} parent=1 // pred_check
      _
    $region31: #{_actor_forward_padded.1} parent=1 // pred_check_branch
      %31 = sbr.rel (0) target = $region33
    $region32: #{_actor_forward_padded.1} parent=1 // pred_region
      _
    $region33: #{_actor_forward_padded.1} parent=1 // pred_fallthru
      _
    // Predicated region
    $region34: #{_actor_forward_padded.1} parent=1 // pred_check
      _
    $region35: #{_actor_forward_padded.1} parent=1 // pred_check_branch
      %33 = sbr.rel (0) target = $region37
    $region36: #{_actor_forward_padded.1} parent=1 // pred_region
      _
    $region37: #{_actor_forward_padded.1} parent=1 // pred_fallthru
      _
    // Predicated region
    $region38: #{_actor_forward_padded.1} parent=1 // pred_check
      _
    $region39: #{_actor_forward_padded.1} parent=1 // pred_check_branch
      %35 = sbr.rel (0) target = $region41
    $region40: #{_actor_forward_padded.1} parent=1 // pred_region
      _
    $region41: #{_actor_forward_padded.1} parent=1 // pred_fallthru
      _
    %v37 = vld [vmem:[%s0] sm:$0xf]
    %v38 = vld [vmem:[%s0 + $0x4] sm:$0xf]
    %v39 = vld [vmem:[%s2] sm:$0xf]
    %v40 = vld [vmem:[%s2 + $0x4] sm:$0xf]
    %v41 = vld [vmem:[%s2 + $0x8] sm:$0xf]
    %v42 = vld [vmem:[%s2 + $0xc] sm:$0xf]
    %v43 = vld [vmem:[%s2 + $0x10] sm:$0xf]
    %v44 = vld [vmem:[%s2 + $0x14] sm:$0xf]
    %v45 = vld [vmem:[%s2 + $0x18] sm:$0xf]
    %v46 = vld [vmem:[%s2 + $0x1c] sm:$0xf]
    %v47 = vld [vmem:[%s3] sm:$0xff]
    %v48 = vld [vmem:[%s3 + $0x8] sm:$0xff]
    %v49 = vld [vmem:[%s3 + $0x10] sm:$0xff]
    %v50 = vld [vmem:[%s3 + $0x18] sm:$0xff]
    %v51 = vld [vmem:[%s3 + $0x20] sm:$0xff]
    %v52 = vld [vmem:[%s3 + $0x28] sm:$0xff]
    %v53 = vld [vmem:[%s3 + $0x30] sm:$0xff]
    %v54 = vld [vmem:[%s3 + $0x38] sm:$0xff]
    %56 = vset.pattern.permute.xlu0 0
    %57 = vperm.xlu0 %56, %v47
    %v58 = vpop.permute.xlu0 %57
    %61 = vset.pattern.permute.xlu0 0
    %62 = vperm.xlu0 %61, %v48
    %v63 = vpop.permute.xlu0 %62
    %66 = vset.pattern.permute.xlu0 0
    %67 = vperm.xlu0 %66, %v49
    %v68 = vpop.permute.xlu0 %67
    %71 = vset.pattern.permute.xlu0 0
    %72 = vperm.xlu0 %71, %v50
    %v73 = vpop.permute.xlu0 %72
    %76 = vset.pattern.permute.xlu0 0
    %77 = vperm.xlu0 %76, %v51
    %v78 = vpop.permute.xlu0 %77
    %81 = vset.pattern.permute.xlu0 0
    %82 = vperm.xlu0 %81, %v52
    %v83 = vpop.permute.xlu0 %82
    %86 = vset.pattern.permute.xlu0 0
    %87 = vperm.xlu0 %86, %v53
    %v88 = vpop.permute.xlu0 %87
    %91 = vset.pattern.permute.xlu0 0
    %92 = vperm.xlu0 %91, %v54
    %v93 = vpop.permute.xlu0 %92
    %v103 = vunpack.c.l.b16 %v39
    %v104 = vunpack.c.l.b16 %v40
    %v105 = vunpack.c.l.b16 %v41
    %v106 = vunpack.c.l.b16 %v42
    %v107 = vunpack.c.l.b16 %v43
    %v108 = vunpack.c.l.b16 %v44
    %v109 = vunpack.c.l.b16 %v45
    %v110 = vunpack.c.l.b16 %v46
    %v111 = vpack.c.b16 %v104, %v103
    %v112 = vpack.c.b16 %v106, %v105
    %v113 = vpack.c.b16 %v108, %v107
    %v114 = vpack.c.b16 %v110, %v109
    %v117 = vunpack.c.l.b16 %v37
    %v118 = vunpack.c.l.b16 %v38
    %v119 = vpack.c.b16 %v118, %v117
    %vm121 = vcmask 130048
    %v123 = vsel %vm121, %v111, 0
    %v126 = vsel %vm121, %v112, 0
    %v129 = vsel %vm121, %v113, 0
    %v132 = vsel %vm121, %v114, 0
    %134 = vmatprep.subr.bf16.mxu0 0
    %135 = vmatpush1.bf16.msra.mxu0 0
    %136 = vmatprep.subr.bf16.mxu0 0
    %137 = vmatpush1.bf16.msra.mxu0 0
    %138 = vmatprep.subr.bf16.mxu0 0
    %139 = vmatpush1.bf16.msra.mxu0 0
    %140 = vmatprep.subr.bf16.mxu0 0
    %141 = vmatpush1.bf16.msra.mxu0 0
    %142 = vmatprep.subr.bf16.mxu0 0
    %143 = vmatpush1.bf16.msra.mxu0 0
    %144 = vmatprep.subr.bf16.mxu0 0
    %145 = vmatpush1.bf16.msra.mxu0 0
    %146 = vmatprep.subr.bf16.mxu0 0
    %147 = vmatpush1.bf16.msra.mxu0 0
    %148 = vmatprep.subr.bf16.mxu0 0
    %149 = vmatpush1.bf16.msra.mxu0 %v119
    %150 = vmatprep.subr.bf16.mxu0 0
    %151 = vmatpush2.bf16.msra.mxu0 0
    %152 = vmatprep.subr.bf16.mxu0 0
    %153 = vmatpush2.bf16.msra.mxu0 0
    %154 = vmatprep.subr.bf16.mxu0 0
    %155 = vmatpush2.bf16.msra.mxu0 0
    %156 = vmatprep.subr.bf16.mxu0 0
    %157 = vmatpush2.bf16.msra.mxu0 0
    %158 = vmatprep.subr.bf16.mxu0 0
    %159 = vmatpush2.bf16.msra.mxu0 0
    %160 = vmatprep.subr.bf16.mxu0 0
    %161 = vmatpush2.bf16.msra.mxu0 0
    %162 = vmatprep.subr.bf16.mxu0 0
    %163 = vmatpush2.bf16.msra.mxu0 0
    %164 = vmatprep.subr.bf16.mxu0 0
    %165 = vmatpush2.bf16.msra.mxu0 0
    %166 = vmatprep.mubr.bf16.mxu0 0
    %167 = vmatmul.mubr.bf16.gmra.mxu0 %v123
    %v168 = vpop.f32.mrf.mxu0
    %v169 = vadd.f32 %v58, %v168
    %v170 = vpop.f32.mrf.mxu0
    %v171 = vpop.f32.mrf.mxu0
    %v172 = vadd.f32 %v63, %v171
    %v173 = vpop.f32.mrf.mxu0
    %174 = vmatprep.mubr.bf16.mxu0 0
    %175 = vmatmul.mubr.bf16.gmra.mxu0 %v126
    %v176 = vpop.f32.mrf.mxu0
    %v177 = vadd.f32 %v68, %v176
    %v178 = vpop.f32.mrf.mxu0
    %v179 = vpop.f32.mrf.mxu0
    %v180 = vadd.f32 %v73, %v179
    %v181 = vpop.f32.mrf.mxu0
    %182 = vmatprep.mubr.bf16.mxu0 0
    %183 = vmatmul.mubr.bf16.gmra.mxu0 %v129
    %v184 = vpop.f32.mrf.mxu0
    %v185 = vadd.f32 %v78, %v184
    %v186 = vpop.f32.mrf.mxu0
    %v187 = vpop.f32.mrf.mxu0
    %v188 = vadd.f32 %v83, %v187
    %v189 = vpop.f32.mrf.mxu0
    %190 = vmatprep.mubr.bf16.mxu0 0
    %191 = vmatmul.mubr.bf16.gmra.mxu0 %v132
    %v192 = vpop.f32.mrf.mxu0
    %v193 = vadd.f32 %v88, %v192
    %v194 = vpop.f32.mrf.mxu0
    %v195 = vpop.f32.mrf.mxu0
    %v196 = vadd.f32 %v93, %v195
    %v197 = vpop.f32.mrf.mxu0
    %198 = vdwg.mxu0
    %v199 = vmax.f32 %v169, 0.0
    %v200 = vmax.f32 %v172, 0.0
    %v201 = vmax.f32 %v177, 0.0
    %v202 = vmax.f32 %v180, 0.0
    %v203 = vmax.f32 %v185, 0.0
    %v204 = vmax.f32 %v188, 0.0
    %v205 = vmax.f32 %v193, 0.0
    %v206 = vmax.f32 %v196, 0.0
    %v207 = vpack.c.bf16 %v200, %v199
    %v208 = vpack.c.bf16 %v202, %v201
    %v209 = vpack.c.bf16 %v204, %v203
    %v210 = vpack.c.bf16 %v206, %v205
    %v211 = vld [vmem:[%s4] sm:$0xf]
    %v212 = vld [vmem:[%s4 + $0x4] sm:$0xf]
    %v213 = vld [vmem:[%s4 + $0x8] sm:$0xf]
    %v214 = vld [vmem:[%s4 + $0xc] sm:$0xf]
    %v215 = vld [vmem:[%s5] sm:$0xff]
    %v216 = vld [vmem:[%s5 + $0x8] sm:$0xff]
    %v217 = vld [vmem:[%s5 + $0x10] sm:$0xff]
    %v218 = vld [vmem:[%s5 + $0x18] sm:$0xff]
    %220 = vset.pattern.permute.xlu0 0
    %221 = vperm.xlu0 %220, %v215
    %v222 = vpop.permute.xlu0 %221
    %225 = vset.pattern.permute.xlu0 0
    %226 = vperm.xlu0 %225, %v216
    %v227 = vpop.permute.xlu0 %226
    %230 = vset.pattern.permute.xlu0 0
    %231 = vperm.xlu0 %230, %v217
    %v232 = vpop.permute.xlu0 %231
    %235 = vset.pattern.permute.xlu0 0
    %236 = vperm.xlu0 %235, %v218
    %v237 = vpop.permute.xlu0 %236
    %v243 = vunpack.c.l.b16 %v211
    %v244 = vunpack.c.l.b16 %v212
    %v245 = vunpack.c.l.b16 %v213
    %v246 = vunpack.c.l.b16 %v214
    %v247 = vpack.c.b16 %v244, %v243
    %v248 = vpack.c.b16 %v246, %v245
    %vm249 = vcmask 523264
    %v251 = vsel %vm249, %v247, 0
    %v254 = vsel %vm249, %v248, 0
    %256 = vmatprep.subr.bf16.mxu0 0
    %257 = vmatpush1.bf16.msra.mxu0 0
    %258 = vmatprep.subr.bf16.mxu0 0
    %259 = vmatpush1.bf16.msra.mxu0 0
    %260 = vmatprep.subr.bf16.mxu0 0
    %261 = vmatpush1.bf16.msra.mxu0 0
    %262 = vmatprep.subr.bf16.mxu0 0
    %263 = vmatpush1.bf16.msra.mxu0 0
    %264 = vmatprep.subr.bf16.mxu0 0
    %265 = vmatpush1.bf16.msra.mxu0 %v210
    %266 = vmatprep.subr.bf16.mxu0 0
    %267 = vmatpush1.bf16.msra.mxu0 %v209
    %268 = vmatprep.subr.bf16.mxu0 0
    %269 = vmatpush1.bf16.msra.mxu0 %v208
    %270 = vmatprep.subr.bf16.mxu0 0
    %271 = vmatpush1.bf16.msra.mxu0 %v207
    %272 = vmatprep.subr.bf16.mxu0 0
    %273 = vmatpush2.bf16.msra.mxu0 0
    %274 = vmatprep.subr.bf16.mxu0 0
    %275 = vmatpush2.bf16.msra.mxu0 0
    %276 = vmatprep.subr.bf16.mxu0 0
    %277 = vmatpush2.bf16.msra.mxu0 0
    %278 = vmatprep.subr.bf16.mxu0 0
    %279 = vmatpush2.bf16.msra.mxu0 0
    %280 = vmatprep.subr.bf16.mxu0 0
    %281 = vmatpush2.bf16.msra.mxu0 0
    %282 = vmatprep.subr.bf16.mxu0 0
    %283 = vmatpush2.bf16.msra.mxu0 0
    %284 = vmatprep.subr.bf16.mxu0 0
    %285 = vmatpush2.bf16.msra.mxu0 0
    %286 = vmatprep.subr.bf16.mxu0 0
    %287 = vmatpush2.bf16.msra.mxu0 0
    %288 = vmatprep.mubr.bf16.mxu0 0
    %289 = vmatmul.mubr.bf16.gmra.mxu0 %v251
    %v290 = vpop.f32.mrf.mxu0
    %v291 = vadd.f32 %v222, %v290
    %v292 = vpop.f32.mrf.mxu0
    %v293 = vpop.f32.mrf.mxu0
    %v294 = vadd.f32 %v227, %v293
    %v295 = vpop.f32.mrf.mxu0
    %296 = vmatprep.mubr.bf16.mxu0 0
    %297 = vmatmul.mubr.bf16.gmra.mxu0 %v254
    %v298 = vpop.f32.mrf.mxu0
    %v299 = vadd.f32 %v232, %v298
    %v300 = vpop.f32.mrf.mxu0
    %v301 = vpop.f32.mrf.mxu0
    %v302 = vadd.f32 %v237, %v301
    %v303 = vpop.f32.mrf.mxu0
    %304 = vdwg.mxu0
    %v305 = vmax.f32 %v291, 0.0
    %v306 = vmax.f32 %v294, 0.0
    %v307 = vmax.f32 %v299, 0.0
    %v308 = vmax.f32 %v302, 0.0
    %v309 = vpack.c.bf16 %v306, %v305
    %v310 = vpack.c.bf16 %v308, %v307
    %v311 = vld [vmem:[%s6] sm:$0xf]
    %v312 = vld [vmem:[%s6 + $0x4] sm:$0xf]
    %v313 = vld [vmem:[%s6 + $0x8] sm:$0xf]
    %v314 = vld [vmem:[%s6 + $0xc] sm:$0xf]
    %v315 = vld [vmem:[%s7] sm:$0xff]
    %v316 = vld [vmem:[%s7 + $0x8] sm:$0xff]
    %v317 = vld [vmem:[%s7 + $0x10] sm:$0xff]
    %v318 = vld [vmem:[%s7 + $0x18] sm:$0xff]
    %320 = vset.pattern.permute.xlu0 0
    %321 = vperm.xlu0 %320, %v315
    %v322 = vpop.permute.xlu0 %321
    %325 = vset.pattern.permute.xlu0 0
    %326 = vperm.xlu0 %325, %v316
    %v327 = vpop.permute.xlu0 %326
    %330 = vset.pattern.permute.xlu0 0
    %331 = vperm.xlu0 %330, %v317
    %v332 = vpop.permute.xlu0 %331
    %335 = vset.pattern.permute.xlu0 0
    %336 = vperm.xlu0 %335, %v318
    %v337 = vpop.permute.xlu0 %336
    %v343 = vunpack.c.l.b16 %v311
    %v344 = vunpack.c.l.b16 %v312
    %v345 = vunpack.c.l.b16 %v313
    %v346 = vunpack.c.l.b16 %v314
    %v347 = vpack.c.b16 %v344, %v343
    %v348 = vpack.c.b16 %v346, %v345
    %vm349 = vcmask 261120
    %v351 = vsel %vm349, %v347, 0
    %v354 = vsel %vm349, %v348, 0
    %356 = vmatprep.subr.bf16.mxu0 0
    %357 = vmatpush1.bf16.msra.mxu0 0
    %358 = vmatprep.subr.bf16.mxu0 0
    %359 = vmatpush1.bf16.msra.mxu0 0
    %360 = vmatprep.subr.bf16.mxu0 0
    %361 = vmatpush1.bf16.msra.mxu0 0
    %362 = vmatprep.subr.bf16.mxu0 0
    %363 = vmatpush1.bf16.msra.mxu0 0
    %364 = vmatprep.subr.bf16.mxu0 0
    %365 = vmatpush1.bf16.msra.mxu0 0
    %366 = vmatprep.subr.bf16.mxu0 0
    %367 = vmatpush1.bf16.msra.mxu0 0
    %368 = vmatprep.subr.bf16.mxu0 0
    %369 = vmatpush1.bf16.msra.mxu0 %v310
    %370 = vmatprep.subr.bf16.mxu0 0
    %371 = vmatpush1.bf16.msra.mxu0 %v309
    %372 = vmatprep.subr.bf16.mxu0 0
    %373 = vmatpush2.bf16.msra.mxu0 0
    %374 = vmatprep.subr.bf16.mxu0 0
    %375 = vmatpush2.bf16.msra.mxu0 0
    %376 = vmatprep.subr.bf16.mxu0 0
    %377 = vmatpush2.bf16.msra.mxu0 0
    %378 = vmatprep.subr.bf16.mxu0 0
    %379 = vmatpush2.bf16.msra.mxu0 0
    %380 = vmatprep.subr.bf16.mxu0 0
    %381 = vmatpush2.bf16.msra.mxu0 0
    %382 = vmatprep.subr.bf16.mxu0 0
    %383 = vmatpush2.bf16.msra.mxu0 0
    %384 = vmatprep.subr.bf16.mxu0 0
    %385 = vmatpush2.bf16.msra.mxu0 0
    %386 = vmatprep.subr.bf16.mxu0 0
    %387 = vmatpush2.bf16.msra.mxu0 0
    %388 = vmatprep.mubr.bf16.mxu0 0
    %389 = vmatmul.mubr.bf16.gmra.mxu0 %v351
    %v390 = vpop.f32.mrf.mxu0
    %v391 = vadd.f32 %v322, %v390
    %v392 = vpop.f32.mrf.mxu0
    %v393 = vpop.f32.mrf.mxu0
    %v394 = vadd.f32 %v327, %v393
    %v395 = vpop.f32.mrf.mxu0
    %396 = vmatprep.mubr.bf16.mxu0 0
    %397 = vmatmul.mubr.bf16.gmra.mxu0 %v354
    %v398 = vpop.f32.mrf.mxu0
    %v399 = vadd.f32 %v332, %v398
    %v400 = vpop.f32.mrf.mxu0
    %v401 = vpop.f32.mrf.mxu0
    %v402 = vadd.f32 %v337, %v401
    %v403 = vpop.f32.mrf.mxu0
    %404 = vdwg.mxu0
    %v405 = vld [vmem:[%s8] sm:$0x3]
    %v406 = vld [vmem:[%s9] sm:$0x3]
    %408 = vset.pattern.permute.xlu0 0
    %409 = vperm.xlu0 %408, %v406
    %v410 = vpop.permute.xlu0 %409
    %v413 = vsel %vm349, %v405, 0
    %415 = vmatprep.subr.mxu0 0.0
    %416 = vmatpush1.msra.mxu0 0.0
    %417 = vmatprep.subr.mxu0 0.0
    %418 = vmatpush1.msra.mxu0 0.0
    %419 = vmatprep.subr.mxu0 0.0
    %420 = vmatpush1.msra.mxu0 0.0
    %421 = vmatprep.subr.mxu0 0.0
    %422 = vmatpush1.msra.mxu0 0.0
    %423 = vmatprep.subr.mxu0 0.0
    %424 = vmatpush1.msra.mxu0 0.0
    %425 = vmatprep.subr.mxu0 0.0
    %426 = vmatpush1.msra.mxu0 0.0
    %427 = vmatprep.subr.mxu0 0.0
    %428 = vmatpush1.msra.mxu0 0.0
    %429 = vmatprep.subr.mxu0 0.0
    %430 = vmatpush1.msra.mxu0 0.0
    %431 = vmatprep.subr.mxu0 0.0
    %432 = vmatpush1.msra.mxu0 0.0
    %433 = vmatprep.subr.mxu0 0.0
    %434 = vmatpush1.msra.mxu0 0.0
    %435 = vmatprep.subr.mxu0 0.0
    %436 = vmatpush1.msra.mxu0 0.0
    %437 = vmatprep.subr.mxu0 0.0
    %438 = vmatpush1.msra.mxu0 0.0
    %439 = vmatprep.subr.mxu0 0.0
    %440 = vmatpush1.msra.mxu0 %v402
    %441 = vmatprep.subr.mxu0 0.0
    %442 = vmatpush1.msra.mxu0 %v399
    %443 = vmatprep.subr.mxu0 0.0
    %444 = vmatpush1.msra.mxu0 %v394
    %445 = vmatprep.subr.mxu0 0.0
    %446 = vmatpush1.msra.mxu0 %v391
    %447 = vmatprep.subr.mxu0 0.0
    %448 = vmatpush2.msra.mxu0 0.0
    %449 = vmatprep.subr.mxu0 0.0
    %450 = vmatpush2.msra.mxu0 0.0
    %451 = vmatprep.subr.mxu0 0.0
    %452 = vmatpush2.msra.mxu0 0.0
    %453 = vmatprep.subr.mxu0 0.0
    %454 = vmatpush2.msra.mxu0 0.0
    %455 = vmatprep.subr.mxu0 0.0
    %456 = vmatpush2.msra.mxu0 0.0
    %457 = vmatprep.subr.mxu0 0.0
    %458 = vmatpush2.msra.mxu0 0.0
    %459 = vmatprep.subr.mxu0 0.0
    %460 = vmatpush2.msra.mxu0 0.0
    %461 = vmatprep.subr.mxu0 0.0
    %462 = vmatpush2.msra.mxu0 0.0
    %463 = vmatprep.subr.mxu0 0.0
    %464 = vmatpush2.msra.mxu0 0.0
    %465 = vmatprep.subr.mxu0 0.0
    %466 = vmatpush2.msra.mxu0 0.0
    %467 = vmatprep.subr.mxu0 0.0
    %468 = vmatpush2.msra.mxu0 0.0
    %469 = vmatprep.subr.mxu0 0.0
    %470 = vmatpush2.msra.mxu0 0.0
    %471 = vmatprep.subr.mxu0 0.0
    %472 = vmatpush2.msra.mxu0 0.0
    %473 = vmatprep.subr.mxu0 0.0
    %474 = vmatpush2.msra.mxu0 0.0
    %475 = vmatprep.subr.mxu0 0.0
    %476 = vmatpush2.msra.mxu0 0.0
    %477 = vmatprep.subr.mxu0 0.0
    %478 = vmatpush2.msra.mxu0 0.0
    %479 = vmatprep.mubr.f32.mxu0 0.0
    %480 = vmatmul.mubr.f32.gmra.mxu0 %v413
    %v481 = vpop.f32.mrf.mxu0
    %v482 = vadd.f32 %v410, %v481
    %v483 = vpop.f32.mrf.mxu0
    %484 = vdwg.mxu0
    %v485 = vmax.f32 %v482, -20.0
    %v486 = vmin.f32 %v485, 2.0
    %v487 = vmul.f32 %v486, 1.442695
    %v488 = vpow.pop %v487
    %v489 = vmax.f32 %v488, 1e-06
    %v490 = vmax.f32 %v486, -13.815511
    %v491 = vld [vmem:[%s1] sm:$0x1]
    %v493 = vlaneseq
    %v494 = vshrl.u32 %v493, 7
    %v495 = vsub.s32 0, %v494
    %v496 = vrot.slane %v491, %v495
    %v498 = vmul.f32 %v489, %v496
    %v500 = vrot.slane %v498, 1
    %v502 = vadd.f32 %v482, %v500
    %v503 = vmul.f32 %v491, -0.5
    %v504 = vmul.f32 %v503, %v491
    %v507 = vunpack.c.l.s4 1966171168
    %v508 = vunpack.c.0.s8 %v507
    %v509 = vlaneseq
    %v510 = vshrl.u32 %v509, 7
    %v511 = vsub.s32 %v508, %v510
    %v512 = vrot.slane %v490, %v511
    %v513 = vcombine.high %v512, %v512
    %v515 = vunpack.c.l.s4 1966171168
    %v516 = vunpack.c.0.s8 %v515
    %v517 = vlaneseq
    %v518 = vshrl.u32 %v517, 7
    %v519 = vsub.s32 %v516, %v518
    %v520 = vrot.slane %v513, %v519
    %v522 = vsub.f32 %v504, %v520
    %v523 = vsub.f32 %v522, 0.9189385
    %v524 = vmul.f32 %v502, -2.0
    %v525 = vmax.f32 %v524, 0.0
    %v526 = vand.u32 2147483647, %v524
    %v527 = vsub.f32 0.0, %v526
    %v528 = vmul.f32 %v527, 1.442695
    %v529 = vpow.pop %v528
    %v530 = vadd.f32 %v529, 1.0
    %v531 = vlog2.pop %v530
    %v532 = vmul.f32 %v531, 0.6931472
    %v533 = vmul.f32 -0.5, %v529
    %v534 = vadd.f32 %v533, 1.0
    %v535 = vmul.f32 %v534, %v529
    %v536 = vand.u32 2147483647, %v529
    %vm537 = vcmp.lt.f32.partialorder %v536, 0.0004427343
    %v538 = vsel %vm537, %v535, %v532
    %v539 = vadd.f32 %v525, %v538
    %v540 = vsub.f32 0.6931472, %v502
    %v541 = vsub.f32 %v540, %v539
    %v542 = vmul.f32 %v541, 2.0
    %v543 = vtanh.pop %v502
    %544 = vst [vmem:[#allocation2] sm:$0x1] %v543
    %v545 = vsub.f32 %v523, %v542
    %546 = vst [vmem:[#allocation2 + $0x1] sm:$0x1] %v545
    // Predicated region
    $region42: #{_actor_forward_padded.1} parent=1 // pred_check
      _
    $region43: #{_actor_forward_padded.1} parent=1 // pred_check_branch
      %548 = sbr.rel (0) target = $region45
    $region44: #{_actor_forward_padded.1} parent=1 // pred_region
      %s550 = ssub.s32 32, 32
      %551 = vsyncadd [#allocation3], %s550
      %s553 = sshll.u32 [#allocation2], 4
      %s554 = int_to_ptr.vmem [resolvable:$true] %s553
      %556 = dma.vmem_to_hbm [thread:$0]  %s554, 32, %s10, [#allocation3]
    $region45: #{_actor_forward_padded.1} parent=1 // pred_fallthru
      _
    // Predicated region
    $region46: #{_actor_forward_padded.1} parent=1 // pred_check
      _
    $region47: #{_actor_forward_padded.1} parent=1 // pred_check_branch
      %558 = sbr.rel (0) target = $region49
    $region48: #{_actor_forward_padded.1} parent=1 // pred_region
      %559 = dma.done [#allocation3], 32
    $region49: #{_actor_forward_padded.1} parent=1 // pred_fallthru
      _
    %560 = vsyncpa [#allocation3], 1

</llo_original>
